<compile_context>
chip_gen: v7x
topology: tpu7x:2x2x1
jax: 0.10.0
libtpu: 0.0.40
codegen_flags: <defaults>
</compile_context>

<pallas_src>
import functools

import jax
import jax.numpy as jnp
from jax import lax
from jax.experimental import pallas as pl
from jax.experimental.pallas import tpu as pltpu


# ---------------------------------------------------------------------------
# Kernel 1: streaming RSD statistic   y[r] = mean_r * rsqrt(var_r + eps)
# ---------------------------------------------------------------------------
def rsd_stats_kernel(x_ref, y_ref, sum_sc, sq_sc, shift_sc, *, hw, tl, rsd_eps):
    """Row statistics of a (BC, HW) stream, HW tiled along the last grid axis.

    * tl == hw  : the whole row is resident -> exact two-pass mean/variance.
    * tl  < hw  : multi-step path.  Inner loop is pure VPU work (sub/add/mul)
      into lane-wide (TM,128) accumulators; the cross-lane reduce and the
      1-lane output store only happen at the last HW step.
    """
    inv_hw = 1.0 / hw

    if tl == hw:
        # Single reduction step: two-pass statistics, no scratch needed.
        xt = x_ref[...].astype(jnp.float32)
        mean = jnp.sum(xt, axis=-1, keepdims=True) * inv_hw
        d = xt - mean
        # NOTE: hw == 1 yields 0/0 = NaN, matching torch.var_mean(unbiased=True).
        var = jnp.sum(d * d, axis=-1, keepdims=True) / (hw - 1.0)
        y_ref[...] = mean * lax.rsqrt(var + rsd_eps)
        return

    blk_rows = sum_sc.shape[0]
    nslab = tl // 128                      # tl is always 2048 here -> 16 lane tiles
    l = pl.program_id(1)
    last = pl.num_programs(1) - 1
    need_mask = (hw % tl) != 0             # static: only traced for ragged HW

    @pl.when(l == 0)
    def _init():
        # Per-row shift (mean of the first tile, always fully in-bounds since hw > tl)
        # for a numerically robust shifted one-pass variance.
        x0 = x_ref[...].astype(jnp.float32)
        shift = jnp.sum(x0, axis=-1, keepdims=True) * (1.0 / tl)          # (TM, 1)
        shift_sc[...] = jnp.broadcast_to(shift, shift_sc.shape)           # (TM, 128)
        sum_sc[...] = jnp.zeros_like(sum_sc)
        sq_sc[...] = jnp.zeros_like(sq_sc)

    xt = x_ref[...].astype(jnp.float32)    # (TM, tl); bf16 ingest is cast per-tile
    shift = shift_sc[...]                  # (TM, 128)
    if need_mask:
        lane = lax.broadcasted_iota(jnp.int32, (blk_rows, 128), 1)
        base = l * tl

    # Fold TL -> 128 lanes with elementwise VPU ops only (no per-step XLU reduce,
    # no narrow 1-lane accumulator RAW chain); one scratch read-modify-write per step.
    s_part = jnp.zeros((blk_rows, 128), jnp.float32)
    q_part = jnp.zeros((blk_rows, 128), jnp.float32)
    for j in range(nslab):
        d = xt[:, j * 128:(j + 1) * 128] - shift
        if need_mask:
            d = jnp.where(base + j * 128 + lane < hw, d, 0.0)   # zero OOB columns
        s_part = s_part + d
        q_part = q_part + d * d
    sum_sc[...] += s_part
    sq_sc[...] += q_part

    @pl.when(l == last)
    def _finalize():
        s = jnp.sum(sum_sc[...], axis=-1, keepdims=True)        # (TM, 1)  XLU, once
        q = jnp.sum(sq_sc[...], axis=-1, keepdims=True)         # (TM, 1)  XLU, once
        shift1 = shift_sc[:, 0:1]                               # (TM, 1)
        mean = shift1 + s * inv_hw
        # Shifted one-pass unbiased variance (shift-invariant): (Σd² − (Σd)²/HW)/(HW−1)
        var = (q - s * s * inv_hw) / (hw - 1.0)
        y_ref[...] = mean * lax.rsqrt(var + rsd_eps)


# ---------------------------------------------------------------------------
# Optional Pallas tail: 1x1 conv (matmul) + train-mode BatchNorm2d + HSigmoidv2
# (kept only behind pallas_tail=True; by default the tail runs as plain XLA,
#  since it is far too small for the MXU and a separate launch is pure overhead)
# ---------------------------------------------------------------------------
def attn_tail_kernel(y_ref, w_ref, gamma_ref, beta_ref, out_ref, *, bn_eps):
    z = jnp.dot(y_ref[...], w_ref[...], preferred_element_type=jnp.float32)  # (B, K)
    bmean = jnp.mean(z, axis=0, keepdims=True)                               # batch stats
    bdiff = z - bmean
    bvar = jnp.mean(bdiff * bdiff, axis=0, keepdims=True)                    # biased (/B)
    zn = bdiff * lax.rsqrt(bvar + bn_eps) * gamma_ref[...] + beta_ref[...]
    out_ref[...] = jnp.clip(zn + 3.0, 0.0, 6.0) * (1.0 / 6.0)                # HSigmoidv2


# ---------------------------------------------------------------------------
# Tiling / launch helpers
# ---------------------------------------------------------------------------
def _vmem_limit_bytes():
    """32 MiB on v7x (64 MiB physical VMEM), 64 MiB on v5e/v6e (128 MiB physical)."""
    try:
        cap = pltpu.get_tpu_info().vmem_capacity_bytes
    except Exception:
        cap = 64 * 1024 * 1024
    return int(min(64 * 1024 * 1024, max(32 * 1024 * 1024, cap // 2)))


def _select_row_tile(bc, tl, itemsize, max_tm=1024, vmem_budget=20 * 1024 * 1024):
    """Row-tile (sublane) size for the streaming stats kernel.

    Multiple of the dtype sublane packing (8 f32 / 16 bf16 / 32 int8), large enough to
    amortize the ~0.35us per-grid-step overhead, small enough that the double-buffered
    input block stays under budget, and capped so the "parallel" row axis keeps >= 2
    tiles (both v7x TensorCores get work).
    """
    sub = max(8, 32 // itemsize)
    if bc <= sub:
        return bc                                   # block == full dim is always legal
    by_vmem = (vmem_budget // (2 * tl * itemsize)) // sub * sub
    tm = max(sub, min(max_tm, by_vmem))
    bc_ceil = -(-bc // sub) * sub
    tm = min(tm, bc_ceil)
    if tm >= bc:                                    # would leave a single row tile
        half = -(-((bc + 1) // 2) // sub) * sub     # ceil(bc/2) rounded up to `sub`
        tm = max(sub, min(tm, half))
    return tm


def _x_block_spec(tm, tl, deep):
    idx = lambda i, l: (i, l)
    if deep:
        try:
            # Deeper pipelining for small-block / many-step streams (cheap extra buffer).
            return pl.BlockSpec((tm, tl), idx, pipeline_mode=pl.Buffered(3))
        except (TypeError, AttributeError):
            pass
    return pl.BlockSpec((tm, tl), idx)


# ---------------------------------------------------------------------------
# Forward wrapper
# ---------------------------------------------------------------------------
def attn_weights_forward(x, conv_w, bn_gamma, bn_beta, *, rsd_eps=1e-3, bn_eps=1e-5,
                         pallas_tail=False):
    """x: (B, C, H, W) NCHW; conv_w: (K, C); bn_gamma/bn_beta: (K,). Returns (B, K) f32."""
    B, C, H, W = x.shape
    K = conv_w.shape[0]
    HW = H * W
    BC = B * C

    x2d = x.reshape(BC, HW)                  # free row-major reshape; keep input dtype
    itemsize = x2d.dtype.itemsize

    # HW (reduction) tile: whole row when it fits in one lane-tile-friendly block,
    # otherwise a fixed 2048-lane stream tile (multiple of 128 -> legal + slab-foldable).
    TL = HW if HW <= 2048 else 2048
    TM = _select_row_tile(BC, TL, itemsize)
    grid = (pl.cdiv(BC, TM), pl.cdiv(HW, TL))
    n_steps = grid[0] * grid[1]
    blk_bytes = TM * TL * itemsize
    deep_pipeline = blk_bytes <= (1 << 20) and n_steps >= 4

    y_flat = pl.pallas_call(
        functools.partial(rsd_stats_kernel, hw=HW, tl=TL, rsd_eps=float(rsd_eps)),
        out_shape=jax.ShapeDtypeStruct((BC, 1), jnp.float32),
        grid_spec=pltpu.PrefetchScalarGridSpec(
            num_scalar_prefetch=0,
            grid=grid,
            in_specs=[_x_block_spec(TM, TL, deep_pipeline)],
            out_specs=pl.BlockSpec((TM, 1), lambda i, l: (i, 0)),
            scratch_shapes=[
                pltpu.VMEM((TM, 128), jnp.float32),   # Σ(x-shift), lane-wide
                pltpu.VMEM((TM, 128), jnp.float32),   # Σ(x-shift)², lane-wide
                pltpu.VMEM((TM, 128), jnp.float32),   # per-row shift (lane-broadcast)
            ],
        ),
        compiler_params=pltpu.CompilerParams(
            dimension_semantics=("parallel", "arbitrary"),
            vmem_limit_bytes=_vmem_limit_bytes(),
        ),
    )(x2d)

    y = y_flat.reshape(B, C)
    w_ck = conv_w.T.astype(jnp.float32)                   # (C, K)
    gamma = bn_gamma.reshape(1, K).astype(jnp.float32)
    beta = bn_beta.reshape(1, K).astype(jnp.float32)

    if pallas_tail:
        # All-Pallas path (single full-array block); kept for completeness.
        return pl.pallas_call(
            functools.partial(attn_tail_kernel, bn_eps=float(bn_eps)),
            out_shape=jax.ShapeDtypeStruct((B, K), jnp.float32),
            in_specs=[
                pl.BlockSpec((B, C), lambda: (0, 0)),
                pl.BlockSpec((C, K), lambda: (0, 0)),
                pl.BlockSpec((1, K), lambda: (0, 0)),
                pl.BlockSpec((1, K), lambda: (0, 0)),
            ],
            out_specs=pl.BlockSpec((B, K), lambda: (0, 0)),
        )(y, w_ck, gamma, beta)

    # Default: fold the tiny tail (few hundred FLOPs, K << 128) into the XLA graph —
    # a dedicated pallas_call here is pure launch + DMA overhead (perf review item).
    z = y @ w_ck                                           # 1x1 conv, no bias
    bmean = jnp.mean(z, axis=0, keepdims=True)             # BatchNorm2d: fresh module ->
    bdiff = z - bmean                                      # training mode -> batch stats
    bvar = jnp.mean(bdiff * bdiff, axis=0, keepdims=True)  # biased (/B)
    zn = bdiff * lax.rsqrt(bvar + bn_eps) * gamma + beta
    return jnp.clip(zn + 3.0, 0.0, 6.0) * (1.0 / 6.0)      # HSigmoidv2


# ---------------------------------------------------------------------------
# Pure-JAX reference (mirrors the PyTorch module; two-pass unbiased variance)
# ---------------------------------------------------------------------------
def reference_forward(x, conv_w, bn_gamma, bn_beta, *, rsd_eps=1e-3, bn_eps=1e-5):
    B, C, H, W = x.shape
    xf = x.astype(jnp.float32)
    mean = jnp.mean(xf, axis=(2, 3))
    var = jnp.sum((xf - mean[:, :, None, None]) ** 2, axis=(2, 3)) / (H * W - 1)
    y = mean * lax.rsqrt(var + rsd_eps)
    z = y @ conv_w.T.astype(jnp.float32)
    bmean = jnp.mean(z, axis=0, keepdims=True)
    bvar = jnp.mean((z - bmean) ** 2, axis=0, keepdims=True)
    zn = (z - bmean) * lax.rsqrt(bvar + bn_eps) * bn_gamma[None, :] + bn_beta[None, :]
    return jnp.clip(zn + 3.0, 0.0, 6.0) / 6.0


if __name__ == "__main__":
    def run_case(B, C, H, W, K, dtype=jnp.float32, pallas_tail=False, tol=2e-4):
        key = jax.random.PRNGKey(0)
        kx, kw = jax.random.split(key)
        x = jax.random.normal(kx, (B, C, H, W), dtype=jnp.float32).astype(dtype)
        # Conv2d(C, K, 1, bias=False), kaiming_normal_(mode='fan_out', relu): std=sqrt(2/K)
        conv_w = jax.random.normal(kw, (K, C), dtype=jnp.float32) * jnp.sqrt(2.0 / K)
        # BatchNorm2d(K) constant-initialized: weight=1, bias=0
        g = jnp.ones((K,), jnp.float32)
        b = jnp.zeros((K,), jnp.float32)

        out = jax.block_until_ready(
            attn_weights_forward(x, conv_w, g, b, pallas_tail=pallas_tail))
        ref = reference_forward(x, conv_w, g, b)
        assert out.shape == (B, K)
        assert jnp.allclose(out, ref, atol=tol, rtol=tol), (out, ref)

    # Module config: attn_mode=0, num_features=C, num_affine_trans=K, use_rsd/use_bn=True.
    run_case(B=2, C=8, H=16, W=16, K=4)                        # single HW step (TL == HW)
    run_case(B=2, C=8, H=16, W=16, K=4, pallas_tail=True)      # optional all-Pallas tail
    run_case(B=2, C=24, H=64, W=64, K=4)                       # multi-step lane-wide accumulators
    run_case(B=2, C=10, H=60, W=60, K=4)                       # ragged BC/HW: cdiv grid + lane mask
    run_case(B=2, C=16, H=32, W=32, K=4, dtype=jnp.bfloat16, tol=5e-3)  # bf16 ingest (16-row packing)
    print("KERNEL_OK")
</pallas_src>

<mosaic_0001>
module attributes {stable_mosaic.version = 11 : i64} {
  func.func @rsd_stats_kernel(%arg0: i32, %arg1: i32, %arg2: memref<8x256xf32, #tpu.memory_space<vmem>>, %arg3: memref<8x1xf32, #tpu.memory_space<vmem>>, %arg4: memref<8x128xf32, #tpu.memory_space<vmem>>, %arg5: memref<8x128xf32, #tpu.memory_space<vmem>>, %arg6: memref<8x128xf32, #tpu.memory_space<vmem>>) attributes {dimension_semantics = [#tpu.dimension_semantics<parallel>, #tpu.dimension_semantics<arbitrary>], iteration_bounds = array<i64: 2, 1>, scalar_prefetch = 0 : i64, scratch_operands = 3 : i64, tpu.core_type = #tpu.core_type<tc>, window_params = [{transform_indices = @transform_0, window_bounds = array<i64: 8, 256>}, {transform_indices = @transform_1, window_bounds = array<i64: 8, 1>}]} {
    %c0 = arith.constant 0 : index
    %c0_0 = arith.constant 0 : index
    %0 = vector.load %arg2[%c0, %c0_0] : memref<8x256xf32, #tpu.memory_space<vmem>>, vector<8x256xf32>
    %cst = arith.constant dense<0.000000e+00> : vector<8xf32>
    %1 = vector.multi_reduction <add>, %0, %cst [1] : vector<8x256xf32> to vector<8xf32>
    %2 = vector.shape_cast %1 : vector<8xf32> to vector<8x1xf32>
    %cst_1 = arith.constant 3.906250e-03 : f32
    %3 = vector.broadcast %cst_1 : f32 to vector<8x1xf32>
    %4 = arith.mulf %2, %3 : vector<8x1xf32>
    %5 = vector.broadcast %4 : vector<8x1xf32> to vector<8x256xf32>
    %6 = arith.subf %0, %5 : vector<8x256xf32>
    %7 = arith.mulf %6, %6 : vector<8x256xf32>
    %cst_2 = arith.constant dense<0.000000e+00> : vector<8xf32>
    %8 = vector.multi_reduction <add>, %7, %cst_2 [1] : vector<8x256xf32> to vector<8xf32>
    %9 = vector.shape_cast %8 : vector<8xf32> to vector<8x1xf32>
    %cst_3 = arith.constant 2.550000e+02 : f32
    %10 = vector.broadcast %cst_3 : f32 to vector<8x1xf32>
    %11 = arith.divf %9, %10 : vector<8x1xf32>
    %cst_4 = arith.constant 1.000000e-03 : f32
    %12 = vector.broadcast %cst_4 : f32 to vector<8x1xf32>
    %13 = arith.addf %11, %12 : vector<8x1xf32>
    %14 = math.rsqrt %13 : vector<8x1xf32>
    %15 = arith.mulf %4, %14 : vector<8x1xf32>
    %c0_5 = arith.constant 0 : index
    %c0_6 = arith.constant 0 : index
    %16 = vector.load %arg3[%c0_5, %c0_6] : memref<8x1xf32, #tpu.memory_space<vmem>>, vector<8x1xf32>
    tpu.vector_store %arg3[%c0_5, %c0_6], %15 {strides = array<i32>} : memref<8x1xf32, #tpu.memory_space<vmem>>, vector<8x1xf32>,
    return
  }
  func.func @transform_0(%arg0: i32, %arg1: i32) -> (i32, i32) {
    %c0_i32 = arith.constant 0 : i32
    return %arg0, %arg1 : i32, i32
  }
  func.func @transform_1(%arg0: i32, %arg1: i32) -> (i32, i32) {
    %c0_i32 = arith.constant 0 : i32
    %c0_i32_0 = arith.constant 0 : i32
    return %arg0, %c0_i32 : i32, i32
  }
}

</mosaic_0001>

<llo_original>
// kernel: tpu_custom_call.1
$region0: #{tpu_custom_call.1}
  #allocation0 [shape = 'u32[]', space=smem, size = 0x4, offset = 0x4, fixed_abs, tag = 'smem constant byte address 0x4 - core index']
  #allocation1 [shape = 'u32[144,128]{1,0:T(1,128)}', space=vmem, size = 0x12000, scoped, tag = 'internal scratch']
  #allocation2 [shape = 'f32[8,128]{1,0:T(8,128)}', space=vmem, size = 0x1000, scoped, tag = 'scratch operand']
  #allocation3 [shape = 'f32[8,128]{1,0:T(8,128)}', space=vmem, size = 0x1000, scoped, tag = 'scratch operand']
  #allocation4 [shape = 'f32[8,128]{1,0:T(8,128)}', space=vmem, size = 0x1000, scoped, tag = 'scratch operand']
  %s0 = inlined_call_operand.hbm [shape: f32[16,256], index: 0, kind: input, shape index: {}]
  %s1 = inlined_call_operand.vmem [shape: f32[16,1], index: 1, kind: output, shape index: {}]
  %s2 = sld [smem:[#allocation0]]
  $region41: #{tpu_custom_call.1} parent=0
    _
  %s4 = ssub.s32 1, %s2
  %s5 = scalar_select 0, %s4, %s2
  $region1: #{tpu_custom_call.1} parent=0
    #allocation5 [shape = 'u8[16384]{0}', space=vmem, size = 0x4000, scoped, tag = 'input window, operand 0']
    #allocation6 [shape = 's32[2]{0}', space=sflag, size = 0x8, scoped, tag = 'scoped memory for tpu_custom_call.1']
    %6 = vsyncpa [#allocation6], 0
    %s7 = scalar_lea.sflag [#allocation6], 1
    %8 = vsyncpa %s7, 0
    loop: start=0, step=1, limit=4
    $region2: #{tpu_custom_call.1} parent=1 // loop_pre_header
      _
    $region3: #{tpu_custom_call.1} parent=1 // loop_header
      %s10 = sphi 0, %s14
      %p11 = scmp.ge.s32.totalorder %s10, 4
      %s17 = sphi 0, %s29
      %s18 = sphi 0, %s25
      %s19 = sphi 0, %s17
      %s20 = sphi 0, %s18
      %s21 = sphi 0, %s19
      %s22 = sphi 0, %s20
      %s34 = sphi 0, %s36
      %s37 = sphi 0, %s34
      %s38 = sphi 0, %s37
      %s54 = sphi 0, %s38
      %s60 = sphi 0, %s62
      %s63 = sphi 0, %s60
      %s64 = sphi 0, %s63
      %s80 = sphi 0, %s64
    $region4: #{tpu_custom_call.1} parent=1 // loop_header_branch
      %13 = sbr.rel (%p11) target = $region8
    $region5: #{tpu_custom_call.1} parent=1 // loop_body
      %s15 = ssub.s32 %s10, 1
      %s16 = ssub.s32 %s10, 2
      %s23 = sadd.s32 1, %s18
      %p24 = scmp.ge.s32.totalorder %s23, 1
      %s25 = scalar_select %p24, 0, %s23
      %s26 = sadd.s32 1, %s17
      %s27 = scalar_select %p24, %s26, %s17
      %p28 = scmp.ge.s32.totalorder %s27, 2
      %s29 = scalar_select %p28, 0, %s27
      %s30 = ssub.s32 %s17, %s29
      %s31 = ssub.s32 %s18, %s25
      %s32 = sor.u32 %s30, %s31
      %p33 = scmp.eq.s32.totalorder %s32, 0
      %s35 = sadd.s32 %s34, 1
      %s36 = scalar_select %p33, %s34, %s35
      %p39 = pneg %p33
      %p40 = scmp.eq.s32.totalorder %s10, 1
      %p41 = por %p39, %p40
      %p42 = scmp.ne.s32.totalorder %s34, %s37
      %p43 = scmp.eq.s32.totalorder %s10, 0
      %p44 = por %p42, %p43
      %p45 = scmp.ne.s32.totalorder %s34, %s37
      %p46 = scmp.eq.s32.totalorder %s15, 1
      %p47 = por %p45, %p46
      %p48 = scmp.ne.s32.totalorder %s37, %s38
      %p49 = scmp.eq.s32.totalorder %s15, 0
      %p50 = por %p48, %p49
      %p51 = scmp.ne.s32.totalorder %s37, %s38
      %p52 = scmp.eq.s32.totalorder %s16, 1
      %p53 = por %p51, %p52
      %p55 = scmp.ne.s32.totalorder %s38, %s54
      %p56 = scmp.eq.s32.totalorder %s16, 0
      %p57 = por %p55, %p56
      %s58 = ssub.s32 %s17, %s29
      %p59 = scmp.eq.s32.totalorder %s58, 0
      %s61 = sadd.s32 %s60, 1
      %s62 = scalar_select %p59, %s60, %s61
      %p65 = pneg %p59
      %p66 = scmp.eq.s32.totalorder %s10, 1
      %p67 = por %p65, %p66
      %p68 = scmp.ne.s32.totalorder %s60, %s63
      %p69 = scmp.eq.s32.totalorder %s10, 0
      %p70 = por %p68, %p69
      %p71 = scmp.ne.s32.totalorder %s60, %s63
      %p72 = scmp.eq.s32.totalorder %s15, 1
      %p73 = por %p71, %p72
      %p74 = scmp.ne.s32.totalorder %s63, %s64
      %p75 = scmp.eq.s32.totalorder %s15, 0
      %p76 = por %p74, %p75
      %p77 = scmp.ne.s32.totalorder %s63, %s64
      %p78 = scmp.eq.s32.totalorder %s16, 1
      %p79 = por %p77, %p78
      %p81 = scmp.ne.s32.totalorder %s64, %s80
      %p82 = scmp.eq.s32.totalorder %s16, 0
      %p83 = por %p81, %p82
      %p84 = scmp.le.s32.totalorder 1, %s10
      %p85 = scmp.lt.s32.totalorder %s10, 3
      %p86 = pnand %p84, %p85
      %p87 = pneg %p86
      // Predicated region
      $region9: #{tpu_custom_call.1} parent=5 // pred_check
        _
      $region10: #{tpu_custom_call.1} parent=5 // pred_check_branch
        %89 = sbr.rel (%p86) target = $region12
      $region11: #{tpu_custom_call.1} parent=5 // pred_region
        %s90 = ssub.s32 %s10, 1
      $region12: #{tpu_custom_call.1} parent=5 // pred_fallthru
        _
      %p91 = scmp.lt.s32.totalorder %s10, 2
      // Predicated region
      $region13: #{tpu_custom_call.1} parent=5 // pred_check
        %p92 = pneg %p91
      $region14: #{tpu_custom_call.1} parent=5 // pred_check_branch
        %94 = sbr.rel (%p92) target = $region16
      $region15: #{tpu_custom_call.1} parent=5 // pred_region
        // Predicated region
        $region17: #{tpu_custom_call.1} parent=15 // pred_check
          %p95 = pneg %p44
        $region18: #{tpu_custom_call.1} parent=15 // pred_check_branch
          %97 = sbr.rel (%p95) target = $region20
        $region19: #{tpu_custom_call.1} parent=15 // pred_region
          %s98 = sand.u32 %s34, 1
          %s99 = scalar_lea.sflag [#allocation6], %s98
          %s100 = sand.u32 %s34, 1
          %s101 = smul.addr %s100, 16
          %s102 = scalar_lea.vmem [#allocation5], %s101
          %s103 = smul.u32 2, %s18
          %s105 = ssub.s32 256, 256
          %106 = vsyncadd %s99, %s105
          %s107 = smul.addr %s17, 2
          %s108 = sadd.s32 %s103, %s107
          %s109 = smul.addr %s108, 128
          %s110 = scalar_lea.hbm %s0, %s109
          %s112 = sshll.u32 %s102, 4
          %s113 = int_to_ptr.vmem [resolvable:$true] %s112
          %115 = dma.hbm_to_vmem [thread:$0]  %s110, 256, %s113, %s99
        $region20: #{tpu_custom_call.1} parent=15 // pred_fallthru
          _
      $region16: #{tpu_custom_call.1} parent=5 // pred_fallthru
        _
      %p116 = scmp.le.s32.totalorder 1, %s10
      %p117 = scmp.lt.s32.totalorder %s10, 3
      %p118 = pnand %p116, %p117
      %p119 = pneg %p118
      // Predicated region
      $region21: #{tpu_custom_call.1} parent=5 // pred_check
        _
      $region22: #{tpu_custom_call.1} parent=5 // pred_check_branch
        %121 = sbr.rel (%p118) target = $region24
      $region23: #{tpu_custom_call.1} parent=5 // pred_region
        %s122 = ssub.s32 %s10, 1
        %s123 = sand.u32 %s37, 1
        %s124 = scalar_lea.sflag [#allocation6], %s123
        %s125 = sand.u32 %s37, 1
        %s126 = smul.addr %s125, 16
        %s127 = scalar_lea.vmem [#allocation5], %s126
        // Predicated region
        $region25: #{tpu_custom_call.1} parent=23 // pred_check
          %p128 = pneg %p50
        $region26: #{tpu_custom_call.1} parent=23 // pred_check_branch
          %130 = sbr.rel (%p128) target = $region28
        $region27: #{tpu_custom_call.1} parent=23 // pred_region
          %131 = dma.done %s124, 256
        $region28: #{tpu_custom_call.1} parent=23 // pred_fallthru
          _
        %s132 = sand.u32 %s37, 1
        %s133 = scalar_lea.sflag [#allocation6], %s132
        %s134 = sand.u32 %s37, 1
        %s135 = smul.addr %s134, 16
        %s136 = scalar_lea.vmem [#allocation5], %s135
        %p137 = pneg %p50
        %p138 = pneg %p47
        %p139 = pneg %p76
        %p140 = pneg %p73
        %p141 = scmp.lt.s32.totalorder %s19, 1
        %s142 = scalar_select %p141, %s19, 1
        %s143 = smul.addr %s142, 8
        %s144 = scalar_lea.vmem %s1, %s143
        %s145 = smul.u32 2, %s20
        %p146 = scmp.lt.s32.totalorder %s19, 1
        %s147 = scalar_select %p146, %s19, 1
        %s148 = smul.addr %s147, 8
        %s149 = scalar_lea.vmem %s1, %s148
        %v150 = vld [vmem:[%s127] sm:$0xff]
        %v151 = vld [vmem:[%s127 + $0x8] sm:$0xff]
        %v152 = vadd.f32 %v150, %v151
        %153 = vadd.xlane.f32.xlu0 %v152
        %v154 = vpop.xlane.xlu0 %153
        %v155 = vmul.f32 %v154, 0.00390625
        %v156 = vsub.f32 %v150, %v155
        %v157 = vsub.f32 %v151, %v155
        %v158 = vmul.f32 %v156, %v156
        %v159 = vmul.f32 %v157, %v157
        %v160 = vadd.f32 %v158, %v159
        %161 = vadd.xlane.f32.xlu0 %v160
        %v162 = vpop.xlane.xlu0 %161
        %v163 = vrcp.pop 255.0
        %v164 = vmul.f32 %v162, %v163
        %v165 = vadd.f32 %v164, 0.001
        %v166 = vrsqrt.pop %v165
        %v167 = vmul.f32 %v155, %v166
        %vm168 = vcmask 7168
        %169 = vst.msk [vmem:[%s149] sm:$0xff] %vm168, %v167
        %p170 = scmp.lt.s32.totalorder %s19, 1
        %s171 = scalar_select %p170, %s19, 1
        %s172 = smul.addr %s171, 8
        %s173 = scalar_lea.vmem %s1, %s172
        // Predicated region
        $region29: #{tpu_custom_call.1} parent=23 // pred_check
          %p174 = pneg %p73
        $region30: #{tpu_custom_call.1} parent=23 // pred_check_branch
          %176 = sbr.rel (%p174) target = $region32
        $region31: #{tpu_custom_call.1} parent=23 // pred_region
          _
        $region32: #{tpu_custom_call.1} parent=23 // pred_fallthru
          _
      $region24: #{tpu_custom_call.1} parent=5 // pred_fallthru
        _
      %p177 = scmp.le.s32.totalorder 2, %s10
      // Predicated region
      $region33: #{tpu_custom_call.1} parent=5 // pred_check
        %p178 = pneg %p177
      $region34: #{tpu_custom_call.1} parent=5 // pred_check_branch
        %180 = sbr.rel (%p178) target = $region36
      $region35: #{tpu_custom_call.1} parent=5 // pred_region
        %s181 = ssub.s32 %s10, 2
        // Predicated region
        $region37: #{tpu_custom_call.1} parent=35 // pred_check
          %p182 = pneg %p79
        $region38: #{tpu_custom_call.1} parent=35 // pred_check_branch
          %184 = sbr.rel (%p182) target = $region40
        $region39: #{tpu_custom_call.1} parent=35 // pred_region
          %p185 = scmp.lt.s32.totalorder %s21, 1
          %s186 = scalar_select %p185, %s21, 1
          %s187 = smul.addr %s186, 8
          %s188 = scalar_lea.vmem %s1, %s187
        $region40: #{tpu_custom_call.1} parent=35 // pred_fallthru
          _
      $region36: #{tpu_custom_call.1} parent=5 // pred_fallthru
        _
    $region6: #{tpu_custom_call.1} parent=1 // loop_footer
      %s14 = sadd.s32 1, %s10
    $region7: #{tpu_custom_call.1} parent=1 // loop_footer_branch
      %9 = sbr.rel target = $region3
    $region8: #{tpu_custom_call.1} parent=1 // loop_exit
      _
    %189 = vsyncpa [#allocation6], 1
    %s190 = scalar_lea.sflag [#allocation6], 1
    %191 = vsyncpa %s190, 1

</llo_original>
